<compile_context>
chip_gen: v6e
topology: v6e:2x2x1
jax: 0.10.0
libtpu: 0.0.40
codegen_flags: <defaults>
</compile_context>

<pallas_src>
import functools

import jax
import jax.numpy as jnp
from jax import lax
from jax.experimental import pallas as pl
from jax.experimental.pallas import tpu as pltpu


def _make_rmsnorm_kernel(d_x, partial_size, eps, has_bias):
    """Kernel factory; all config is static (baked at trace time)."""
    use_partial = partial_size is not None

    def kernel(*refs):
        if has_bias:
            x_ref, scale_ref, offset_ref, o_ref = refs
        else:
            x_ref, scale_ref, o_ref = refs

        # (tr, d) block; compute in f32 (v5e has no bf16 VPU/EUP datapath anyway).
        x = x_ref[...].astype(jnp.float32)

        if use_partial:
            # partial RMSNorm: norm over the first `partial_size` columns only.
            col = lax.broadcasted_iota(jnp.int32, x.shape, dimension=1)
            xsq = jnp.where(col < partial_size, x * x, 0.0)
        else:
            xsq = x * x

        ss = jnp.sum(xsq, axis=-1, keepdims=True)          # (tr, 1)
        rms = jnp.sqrt(ss * (1.0 / float(d_x)))            # ||x||_2 / sqrt(d_x)
        inv = 1.0 / (rms + eps)                            # exact div to match torch numerics

        y = x * inv * scale_ref[...].astype(jnp.float32)   # scale broadcast over rows
        if has_bias:
            y = y + offset_ref[...].astype(jnp.float32)

        o_ref[...] = y.astype(o_ref.dtype)

    return kernel


def rmsnorm(x, scale, offset=None, p=-1.0, eps=1e-8,
            vmem_budget_bytes=24 * 1024 * 1024):
    """RMSNorm over the last axis. x: (..., d) -> (..., d)."""
    *lead, d = x.shape
    rows = 1
    for s in lead:
        rows *= s
    x2d = x.reshape(rows, d)

    # torch semantics: partial norm only when 0 <= p <= 1
    if 0.0 <= p <= 1.0:
        partial_size = int(d * p)
        d_x = partial_size
    else:
        partial_size = None
        d_x = d

    has_bias = offset is not None

    # ---- tile-size selection (memory-bound op: go as big as the VMEM budget allows) ----
    in_bytes = jnp.dtype(x.dtype).itemsize
    out_bytes = in_bytes
    pack = max(8, 32 // in_bytes)                 # sublane packing: 8 (32b), 16 (16b), 32 (8b)
    per_row = 2 * d * (in_bytes + out_bytes)      # double-buffered in + out per row
    tr = max(pack, (vmem_budget_bytes // per_row) // pack * pack)
    tr = min(tr, 1024)                            # keep footprint modest (v7x: 64 MiB VMEM, 2 TCs)
    rows_to_pack = pl.cdiv(rows, pack) * pack
    tr = min(tr, rows_to_pack)

    # pad rows to a multiple of tr (zero rows are safe: 0 / (0 + eps) = 0)
    rows_pad = pl.cdiv(rows, tr) * tr
    if rows_pad != rows:
        x2d = jnp.pad(x2d, ((0, rows_pad - rows), (0, 0)))

    grid = (rows_pad // tr,)

    scale2d = jnp.asarray(scale).reshape(1, d)
    inputs = [x2d, scale2d]
    in_specs = [
        pl.BlockSpec((tr, d), lambda i: (i, 0)),
        pl.BlockSpec((1, d), lambda i: (0, 0)),
    ]
    if has_bias:
        inputs.append(jnp.asarray(offset).reshape(1, d))
        in_specs.append(pl.BlockSpec((1, d), lambda i: (0, 0)))

    # size the scoped VMEM limit against the actual double-buffered working set
    needed = 2 * tr * d * (in_bytes + out_bytes) + 8 * d * 4
    vmem_limit = int(min(max(needed + (8 << 20), 32 << 20), 48 << 20))

    kernel = _make_rmsnorm_kernel(d_x, partial_size, eps, has_bias)

    out2d = pl.pallas_call(
        kernel,
        out_shape=jax.ShapeDtypeStruct((rows_pad, d), x.dtype),
        grid_spec=pltpu.PrefetchScalarGridSpec(
            num_scalar_prefetch=0,
            grid=grid,
            in_specs=in_specs,
            out_specs=pl.BlockSpec((tr, d), lambda i: (i, 0)),
        ),
        compiler_params=pltpu.CompilerParams(
            dimension_semantics=("parallel",),
            vmem_limit_bytes=vmem_limit,
        ),
    )(*inputs)

    if rows_pad != rows:
        out2d = out2d[:rows]
    return out2d.reshape(*lead, d)


def _rmsnorm_ref(x, scale, offset=None, p=-1.0, eps=1e-8):
    d = x.shape[-1]
    if 0.0 <= p <= 1.0:
        partial_size = int(d * p)
        norm_x = jnp.linalg.norm(x[..., :partial_size], axis=-1, keepdims=True)
        d_x = partial_size
    else:
        norm_x = jnp.linalg.norm(x, axis=-1, keepdims=True)
        d_x = d
    rms_x = norm_x * d_x ** (-0.5)
    x_normed = x / (rms_x + eps)
    out = scale * x_normed
    if offset is not None:
        out = out + offset
    return out


if __name__ == "__main__":
    key = jax.random.PRNGKey(0)
    B, S, D = 2, 8, 32
    kx, ks, ko = jax.random.split(key, 3)
    x = jax.random.normal(kx, (B, S, D), dtype=jnp.float32)
    scale = 1.0 + 0.1 * jax.random.normal(ks, (D,), dtype=jnp.float32)

    # default path (p disabled, no bias) — matches nn.Module defaults
    out = rmsnorm(x, scale)
    jax.block_until_ready(out)
    ref = _rmsnorm_ref(x, scale)
    assert out.shape == (B, S, D)
    assert jnp.allclose(out, ref, atol=1e-5, rtol=1e-5), "mismatch vs reference (default path)"

    # partial + bias path
    offset = 0.05 * jax.random.normal(ko, (D,), dtype=jnp.float32)
    out2 = rmsnorm(x, scale, offset=offset, p=0.5)
    jax.block_until_ready(out2)
    ref2 = _rmsnorm_ref(x, scale, offset=offset, p=0.5)
    assert jnp.allclose(out2, ref2, atol=1e-5, rtol=1e-5), "mismatch vs reference (partial+bias)"

    print("KERNEL_OK")
</pallas_src>

<mosaic_0001>
module attributes {stable_mosaic.version = 11 : i64} {
  func.func @kernel(%arg0: i32, %arg1: memref<16x32xf32, #tpu.memory_space<vmem>>, %arg2: memref<1x32xf32, #tpu.memory_space<vmem>>, %arg3: memref<16x32xf32, #tpu.memory_space<vmem>>) attributes {dimension_semantics = [#tpu.dimension_semantics<parallel>], iteration_bounds = array<i64: 1>, scalar_prefetch = 0 : i64, scratch_operands = 0 : i64, tpu.core_type = #tpu.core_type<tc>, window_params = [{transform_indices = @transform_0, window_bounds = array<i64: 16, 32>}, {pipeline_mode = #tpu.pipeline_mode<synchronous>, transform_indices = @transform_1, window_bounds = array<i64: 1, 32>}, {transform_indices = @transform_2, window_bounds = array<i64: 16, 32>}]} {
    %c0 = arith.constant 0 : index
    %c0_0 = arith.constant 0 : index
    %0 = vector.load %arg1[%c0, %c0_0] : memref<16x32xf32, #tpu.memory_space<vmem>>, vector<16x32xf32>
    %1 = arith.mulf %0, %0 : vector<16x32xf32>
    %cst = arith.constant dense<0.000000e+00> : vector<16xf32>
    %2 = vector.multi_reduction <add>, %1, %cst [1] : vector<16x32xf32> to vector<16xf32>
    %3 = vector.shape_cast %2 : vector<16xf32> to vector<16x1xf32>
    %cst_1 = arith.constant 3.125000e-02 : f32
    %4 = vector.broadcast %cst_1 : f32 to vector<16x1xf32>
    %5 = arith.mulf %3, %4 : vector<16x1xf32>
    %6 = math.sqrt %5 : vector<16x1xf32>
    %cst_2 = arith.constant 9.99999993E-9 : f32
    %7 = vector.broadcast %cst_2 : f32 to vector<16x1xf32>
    %8 = arith.addf %6, %7 : vector<16x1xf32>
    %cst_3 = arith.constant 1.000000e+00 : f32
    %9 = vector.broadcast %cst_3 : f32 to vector<16x1xf32>
    %10 = arith.divf %9, %8 : vector<16x1xf32>
    %11 = vector.broadcast %10 : vector<16x1xf32> to vector<16x32xf32>
    %12 = arith.mulf %0, %11 : vector<16x32xf32>
    %c0_4 = arith.constant 0 : index
    %c0_5 = arith.constant 0 : index
    %13 = vector.load %arg2[%c0_4, %c0_5] : memref<1x32xf32, #tpu.memory_space<vmem>>, vector<1x32xf32>
    %14 = vector.broadcast %13 : vector<1x32xf32> to vector<16x32xf32>
    %15 = arith.mulf %12, %14 : vector<16x32xf32>
    %c0_6 = arith.constant 0 : index
    %c0_7 = arith.constant 0 : index
    %16 = vector.load %arg3[%c0_6, %c0_7] : memref<16x32xf32, #tpu.memory_space<vmem>>, vector<16x32xf32>
    tpu.vector_store %arg3[%c0_6, %c0_7], %15 {strides = array<i32>} : memref<16x32xf32, #tpu.memory_space<vmem>>, vector<16x32xf32>,
    return
  }
  func.func @transform_0(%arg0: i32) -> (i32, i32) {
    %c0_i32 = arith.constant 0 : i32
    %c0_i32_0 = arith.constant 0 : i32
    return %arg0, %c0_i32 : i32, i32
  }
  func.func @transform_1(%arg0: i32) -> (i32, i32) {
    %c0_i32 = arith.constant 0 : i32
    %c0_i32_0 = arith.constant 0 : i32
    %c0_i32_1 = arith.constant 0 : i32
    return %c0_i32, %c0_i32_0 : i32, i32
  }
  func.func @transform_2(%arg0: i32) -> (i32, i32) {
    %c0_i32 = arith.constant 0 : i32
    %c0_i32_0 = arith.constant 0 : i32
    return %arg0, %c0_i32 : i32, i32
  }
}

</mosaic_0001>

<llo_original>
// kernel: tpu_custom_call.1
$region0: #{tpu_custom_call.1}
  #allocation0 [shape = 'u32[]', space=smem, size = 0x4, offset = 0x4, fixed_abs, tag = 'smem constant byte address 0x4 - core index']
  #allocation1 [shape = 'u32[144,128]{1,0:T(1,128)}', space=vmem, size = 0x12000, scoped, tag = 'internal scratch']
  %s0 = inlined_call_operand.hbm [shape: f32[16,32], index: 0, kind: input, shape index: {}]
  %s1 = inlined_call_operand.vmem [shape: f32[1,32], index: 1, kind: input, shape index: {}]
  %s2 = inlined_call_operand.hbm [shape: f32[16,32], index: 2, kind: output, shape index: {}]
  %s3 = sld [smem:[#allocation0]]
  $region22: #{tpu_custom_call.1} parent=0
    _
  %s5 = ssub.s32 1, %s3
  %s6 = scalar_select 0, %s5, %s3
  $region1: #{tpu_custom_call.1} parent=0
    #allocation2 [shape = 'u8[8192]{0}', space=vmem, size = 0x2000, scoped, tag = 'input window, operand 0, single buffered']
    #allocation3 [shape = 's32[1]{0}', space=sflag, size = 0x4, scoped, tag = 'scoped memory for tpu_custom_call.1']
    #allocation4 [shape = 's32[1]{0}', space=sflag, size = 0x4, scoped, tag = 'scoped memory for tpu_custom_call.1']
    #allocation5 [shape = 'u8[8192]{0}', space=vmem, size = 0x2000, scoped, tag = 'output window, operand 0, single buffered']
    %7 = vsyncpa [#allocation3], 0
    %8 = vsyncpa [#allocation4], 0
    // Predicated region
    $region2: #{tpu_custom_call.1} parent=1 // pred_check
      _
    $region3: #{tpu_custom_call.1} parent=1 // pred_check_branch
      %10 = sbr.rel (0) target = $region5
    $region4: #{tpu_custom_call.1} parent=1 // pred_region
      %s12 = ssub.s32 256, 256
      %13 = vsyncadd [#allocation3], %s12
      %s14 = sshll.u32 [#allocation2], 4
      %s15 = int_to_ptr.vmem [resolvable:$true] %s14
      %20 = dma.hbm_to_vmem [thread:$0]  %s0, 256, %s15, [#allocation3], 128, 128, 8
    $region5: #{tpu_custom_call.1} parent=1 // pred_fallthru
      _
    // Predicated region
    $region6: #{tpu_custom_call.1} parent=1 // pred_check
      _
    $region7: #{tpu_custom_call.1} parent=1 // pred_check_branch
      %22 = sbr.rel (0) target = $region9
    $region8: #{tpu_custom_call.1} parent=1 // pred_region
      _
    $region9: #{tpu_custom_call.1} parent=1 // pred_fallthru
      _
    // Predicated region
    $region10: #{tpu_custom_call.1} parent=1 // pred_check
      _
    $region11: #{tpu_custom_call.1} parent=1 // pred_check_branch
      %24 = sbr.rel (0) target = $region13
    $region12: #{tpu_custom_call.1} parent=1 // pred_region
      %25 = dma.done [#allocation3], 256
    $region13: #{tpu_custom_call.1} parent=1 // pred_fallthru
      _
    %v26 = vld [vmem:[#allocation2] sm:$0xff]
    %v27 = vld [vmem:[#allocation2 + $0x8] sm:$0xff]
    %v28 = vmul.f32 %v26, %v26
    %v29 = vmul.f32 %v27, %v27
    %vm30 = vcmask 261120
    %v31 = vsel %vm30, %v28, 0.0
    %32 = vadd.xlane.f32.xlu0 %v31
    %v33 = vpop.xlane.xlu0 %32
    %v34 = vsel %vm30, %v29, 0.0
    %35 = vadd.xlane.f32.xlu0 %v34
    %v36 = vpop.xlane.xlu0 %35
    %v37 = vmul.f32 %v33, 0.03125
    %v38 = vmul.f32 %v36, 0.03125
    %v39 = vrsqrt.pop %v37
    %v40 = vmul.f32 %v37, %v39
    %vm41 = vcmp.eq.f32.partialorder %v37, inf
    %v42 = vsel %vm41, %v37, %v40
    %vm43 = vcmp.eq.f32.partialorder %v37, 0.0
    %v44 = vand.u32 %v37, 2147483648
    %v45 = vsel %vm43, %v44, %v42
    %v46 = vrsqrt.pop %v38
    %v47 = vmul.f32 %v38, %v46
    %vm48 = vcmp.eq.f32.partialorder %v38, inf
    %v49 = vsel %vm48, %v38, %v47
    %vm50 = vcmp.eq.f32.partialorder %v38, 0.0
    %v51 = vand.u32 %v38, 2147483648
    %v52 = vsel %vm50, %v51, %v49
    %v53 = vadd.f32 %v45, 1e-08
    %v54 = vadd.f32 %v52, 1e-08
    %v55 = vrcp.pop %v53
    %v56 = vmul.f32 1.0, %v55
    %v57 = vrcp.pop %v54
    %v58 = vmul.f32 1.0, %v57
    %v59 = vmul.f32 %v26, %v56
    %v60 = vmul.f32 %v27, %v58
    %v61 = vld [vmem:[%s1] sm:$0x1]
    %v63 = vlaneseq
    %v64 = vshrl.u32 %v63, 7
    %v65 = vsub.s32 0, %v64
    %v66 = vrot.slane %v61, %v65
    %v68 = vmul.f32 %v59, %v66
    %v69 = vmul.f32 %v60, %v66
    %70 = vst.msk [vmem:[#allocation5] sm:$0xff] %vm30, %v68
    %71 = vst.msk [vmem:[#allocation5 + $0x8] sm:$0xff] %vm30, %v69
    // Predicated region
    $region14: #{tpu_custom_call.1} parent=1 // pred_check
      _
    $region15: #{tpu_custom_call.1} parent=1 // pred_check_branch
      %73 = sbr.rel (0) target = $region17
    $region16: #{tpu_custom_call.1} parent=1 // pred_region
      %s75 = ssub.s32 256, 256
      %76 = vsyncadd [#allocation4], %s75
      %s77 = sshll.u32 [#allocation5], 4
      %s78 = int_to_ptr.vmem [resolvable:$true] %s77
      %83 = dma.vmem_to_hbm [thread:$0]  %s78, 256, %s2, [#allocation4], 128, 128, 8
    $region17: #{tpu_custom_call.1} parent=1 // pred_fallthru
      _
    // Predicated region
    $region18: #{tpu_custom_call.1} parent=1 // pred_check
      _
    $region19: #{tpu_custom_call.1} parent=1 // pred_check_branch
      %85 = sbr.rel (0) target = $region21
    $region20: #{tpu_custom_call.1} parent=1 // pred_region
      %86 = dma.done [#allocation4], 256
    $region21: #{tpu_custom_call.1} parent=1 // pred_fallthru
      _
    %87 = vsyncpa [#allocation3], 1
    %88 = vsyncpa [#allocation4], 1

</llo_original>
